<compile_context>
chip_gen: v6e
topology: v6e:2x2x1
jax: 0.10.0
libtpu: 0.0.40
codegen_flags: <defaults>
</compile_context>

<pallas_src>
import functools

import numpy as np
import jax
import jax.numpy as jnp
from jax.experimental import pallas as pl
from jax.experimental.pallas import tpu as pltpu

BN_EPS = 1e-5
VMEM_LIMIT_BYTES = 48 * 1024 * 1024   # < v7x 64 MiB physical, > 16/32 MiB scoped defaults


# ----------------------------------------------------------------------------
# Bilinear (align_corners=True) interpolation matrices, cached per shape.
# ----------------------------------------------------------------------------
def _interp_matrix_1d(out_size: int, in_size: int) -> np.ndarray:
    """1-D bilinear align_corners=True interpolation matrix (out, in)."""
    if out_size == 1:
        src = np.zeros((1,), np.float32)
    else:
        src = np.arange(out_size, dtype=np.float32) * (in_size - 1) / (out_size - 1)
    i0 = np.clip(np.floor(src).astype(np.int64), 0, in_size - 1)
    i1 = np.clip(i0 + 1, 0, in_size - 1)
    w1 = src - i0.astype(np.float32)
    w0 = 1.0 - w1
    M = np.zeros((out_size, in_size), np.float32)
    M[np.arange(out_size), i0] += w0
    M[np.arange(out_size), i1] += w1
    return M


@functools.lru_cache(maxsize=None)
def _interp_matrix_2d_T(H: int, W: int, Hm: int, Wm: int) -> np.ndarray:
    """(Hm*Wm, H*W) matrix: y_hi = y_lo @ M2T  (channels-on-sublanes layout)."""
    Mh = _interp_matrix_1d(H, Hm)
    Mw = _interp_matrix_1d(W, Wm)
    M2 = np.kron(Mh, Mw)                       # (H*W, Hm*Wm), rows sum to 1
    return np.ascontiguousarray(M2.T)          # (Hm*Wm, H*W)


# ----------------------------------------------------------------------------
# Tiling heuristics.
# ----------------------------------------------------------------------------
def _largest_divisor_leq(n: int, cap: int) -> int:
    cap = max(1, min(n, cap))
    for d in range(cap, 0, -1):
        if n % d == 0:
            return d
    return 1


def _pick_spatial_tile(hw: int, target: int = 2048) -> int:
    """Spatial tile: full HW if small, else a multiple-of-128 divisor of HW."""
    if hw <= target:
        return hw
    t = (target // 128) * 128
    for cand in range(t, 0, -128):
        if hw % cand == 0:
            return cand
    return hw


def _pick_batch_block(n: int, c: int, thw: int) -> int:
    """Batches per grid step: fill MXU rows while keeping per-tile VMEM small."""
    target_rows = 512                                   # Bblk*C target (v6e/v7x)
    vmem_cap_rows = max(1, (2 * 1024 * 1024) // (thw * 4))
    rows = max(1, min(target_rows, vmem_cap_rows))
    return _largest_divisor_leq(n, max(1, rows // max(c, 1)))


# ----------------------------------------------------------------------------
# Shared in-kernel compute: y = interp(conv1x1(mask)) for one batch block.
# ----------------------------------------------------------------------------
def _conv_interp(mask_tile, wc_tile, m2t_tile, Bblk, C, HmWm, THW, mm_dtype):
    # 1x1 conv on the LOW-RES slab: shared (C, C) weight, batched over Bblk.
    # Exact reorder vs. PyTorch (interp then conv): conv mixes channels only,
    # the resize mixes space only, so they commute.
    wcb = jnp.broadcast_to(wc_tile, (Bblk, C, C)).astype(mm_dtype)
    y_lo = jax.lax.dot_general(
        wcb, mask_tile.astype(mm_dtype),
        dimension_numbers=(((2,), (1,)), ((0,), (0,))),
        preferred_element_type=jnp.float32)                      # (Bblk, C, HmWm)
    # Bilinear upsample as ONE lane-dense matmul on the flattened slab so the
    # MXU M-dimension is Bblk*C (batch-blocked), N-dimension is the spatial
    # tile: (Bblk*C, HmWm) @ (HmWm, THW).
    y = jnp.dot(y_lo.reshape(Bblk * C, HmWm).astype(mm_dtype),
                m2t_tile.astype(mm_dtype),
                preferred_element_type=jnp.float32)              # (Bblk*C, THW)
    return y.reshape(Bblk, C, THW)


# ----------------------------------------------------------------------------
# Pass 1: training-mode BatchNorm statistics only (no y written to HBM).
# ----------------------------------------------------------------------------
def _make_stats_kernel(Bblk, C, HmWm, THW, num_bb, num_st, inv_count, mm_dtype):
    def kernel(mask_ref, wc_ref, m2t_ref, gamma_ref, beta_ref,
               scale_ref, shift_ref, acc_sum, acc_sq):
        bb = pl.program_id(0)
        st = pl.program_id(1)

        @pl.when((bb == 0) & (st == 0))
        def _():
            acc_sum[...] = jnp.zeros_like(acc_sum)
            acc_sq[...] = jnp.zeros_like(acc_sq)

        y = _conv_interp(mask_ref[...], wc_ref[...], m2t_ref[...],
                         Bblk, C, HmWm, THW, mm_dtype)           # (Bblk, C, THW)

        # Full lane-width accumulator updates (no masked 1-lane stores in the
        # hot loop); the cross-lane reduce is deferred to the finalize below.
        acc_sum[...] += jnp.sum(y, axis=0)
        acc_sq[...] += jnp.sum(y * y, axis=0)

        @pl.when((bb == num_bb - 1) & (st == num_st - 1))
        def _():
            total = jnp.sum(acc_sum[...], axis=1, keepdims=True)      # (C, 1)
            total_sq = jnp.sum(acc_sq[...], axis=1, keepdims=True)    # (C, 1)
            mean = total * inv_count
            var = total_sq * inv_count - mean * mean                  # biased
            scale = gamma_ref[...] * jax.lax.rsqrt(var + BN_EPS)
            scale_ref[...] = scale
            shift_ref[...] = beta_ref[...] - mean * scale

    return kernel


# ----------------------------------------------------------------------------
# Pass 2: recompute y in VMEM, apply BN affine + sigmoid, gate x.  Parallel.
# ----------------------------------------------------------------------------
def _make_gate_kernel(Bblk, C, HmWm, THW, mm_dtype):
    def kernel(x_ref, mask_ref, wc_ref, m2t_ref, scale_ref, shift_ref, o_ref):
        # Recomputing y from the cheap low-res mask tile avoids the HBM
        # round-trip of a full (N, C, HW) intermediate.
        y = _conv_interp(mask_ref[...], wc_ref[...], m2t_ref[...],
                         Bblk, C, HmWm, THW, mm_dtype)           # (Bblk, C, THW)
        gate = jax.nn.sigmoid(y * scale_ref[...] + shift_ref[...])
        o_ref[...] = (x_ref[...] * gate).astype(o_ref.dtype)

    return kernel


# ----------------------------------------------------------------------------
# Wrapper.
# ----------------------------------------------------------------------------
def attention_block(x, mask, conv_w, conv_b, gamma, beta,
                    matmul_dtype=jnp.float32):
    """x: (N, C, H, W); mask: (N, C, Hm, Wm).  Returns (N, C, H, W)."""
    N, C, H, W = x.shape
    _, _, Hm, Wm = mask.shape
    HW, HmWm = H * W, Hm * Wm

    # The conv bias is a per-channel constant added BEFORE training-mode
    # BatchNorm, so the batch mean cancels it exactly -> drop it.
    del conv_b

    THW = _pick_spatial_tile(HW)
    Bblk = _pick_batch_block(N, C, THW)
    num_bb, num_st = N // Bblk, HW // THW

    # Small shared interpolation matrix, cached across calls; spatially tiled
    # via its BlockSpec so it never has to fit VMEM whole.
    m2t = jnp.asarray(_interp_matrix_2d_T(H, W, Hm, Wm))         # (HmWm, HW)

    # (C, spatial) layout == plain NCHW reshape: no wrapper transposes.
    x_r = x.reshape(N, C, HW)
    mask_r = mask.reshape(N, C, HmWm)
    wc = conv_w.reshape(C, C).astype(jnp.float32)
    g2 = gamma.reshape(C, 1).astype(jnp.float32)
    be2 = beta.reshape(C, 1).astype(jnp.float32)

    inv_count = 1.0 / float(N * HW)

    mask_spec = pl.BlockSpec((Bblk, C, HmWm), lambda bb, st: (bb, 0, 0))
    wc_spec = pl.BlockSpec((C, C), lambda bb, st: (0, 0))
    m2t_spec = pl.BlockSpec((HmWm, THW), lambda bb, st: (0, st))
    cvec_spec = pl.BlockSpec((C, 1), lambda bb, st: (0, 0))
    xtile_spec = pl.BlockSpec((Bblk, C, THW), lambda bb, st: (bb, 0, st))

    # ---------------- Pass 1: BN statistics (stats-only). ----------------
    pass1_cost = pl.CostEstimate(
        flops=2 * N * C * C * HmWm + 2 * N * C * HmWm * HW + 6 * N * C * HW,
        transcendentals=C,
        bytes_accessed=4 * (N * C * HmWm + C * C + num_bb * HmWm * HW + 4 * C))
    scale, shift = pl.pallas_call(
        _make_stats_kernel(Bblk, C, HmWm, THW, num_bb, num_st, inv_count,
                           matmul_dtype),
        grid=(num_bb, num_st),
        in_specs=[mask_spec, wc_spec, m2t_spec, cvec_spec, cvec_spec],
        out_specs=[cvec_spec, cvec_spec],
        out_shape=[jax.ShapeDtypeStruct((C, 1), jnp.float32),
                   jax.ShapeDtypeStruct((C, 1), jnp.float32)],
        scratch_shapes=[pltpu.VMEM((C, THW), jnp.float32),
                        pltpu.VMEM((C, THW), jnp.float32)],
        compiler_params=pltpu.CompilerParams(
            dimension_semantics=("arbitrary", "arbitrary"),  # shared accumulator
            vmem_limit_bytes=VMEM_LIMIT_BYTES),
        cost_estimate=pass1_cost,
    )(mask_r, wc, m2t, g2, be2)

    # --------- Pass 2: recompute y, normalize, sigmoid, gate x. ----------
    pass2_cost = pl.CostEstimate(
        flops=2 * N * C * C * HmWm + 2 * N * C * HmWm * HW + 5 * N * C * HW,
        transcendentals=N * C * HW,
        bytes_accessed=4 * (2 * N * C * HW + N * C * HmWm
                            + num_bb * HmWm * HW + C * C + 2 * C))
    out_r = pl.pallas_call(
        _make_gate_kernel(Bblk, C, HmWm, THW, matmul_dtype),
        grid=(num_bb, num_st),
        in_specs=[xtile_spec, mask_spec, wc_spec, m2t_spec, cvec_spec, cvec_spec],
        out_specs=xtile_spec,
        out_shape=jax.ShapeDtypeStruct((N, C, HW), x.dtype),
        compiler_params=pltpu.CompilerParams(
            dimension_semantics=("parallel", "parallel"),    # megacore-friendly
            vmem_limit_bytes=VMEM_LIMIT_BYTES),
        cost_estimate=pass2_cost,
    )(x_r, mask_r, wc, m2t, scale, shift)

    return out_r.reshape(N, C, H, W)


# ----------------------------------------------------------------------------
# Pure-JAX reference (PyTorch order: interp -> conv(+bias) -> BN(train) -> sigmoid).
# ----------------------------------------------------------------------------
def reference(x, mask, conv_w, conv_b, gamma, beta):
    N, C, H, W = x.shape
    _, _, Hm, Wm = mask.shape
    Mh = jnp.asarray(_interp_matrix_1d(H, Hm))
    Mw = jnp.asarray(_interp_matrix_1d(W, Wm))
    mi = jnp.einsum('ah,nchw->ncaw', Mh, mask)
    mi = jnp.einsum('bw,ncaw->ncab', Mw, mi)
    y = jnp.einsum('oc,nchw->nohw', conv_w.reshape(C, C), mi)
    y = y + conv_b[None, :, None, None]
    mean = y.mean(axis=(0, 2, 3), keepdims=True)
    var = ((y - mean) ** 2).mean(axis=(0, 2, 3), keepdims=True)   # biased
    yhat = (y - mean) / jnp.sqrt(var + BN_EPS)
    yhat = yhat * gamma[None, :, None, None] + beta[None, :, None, None]
    return x * jax.nn.sigmoid(yhat)


if __name__ == "__main__":
    N, C, H, W = 2, 4, 16, 16      # x spatial size
    Hm, Wm = 8, 8                  # mask spatial size (upsampled to 16x16)

    key = jax.random.PRNGKey(0)
    kx, km, kw, kb, kg, kbe = jax.random.split(key, 6)

    x = jax.random.normal(kx, (N, C, H, W), dtype=jnp.float32)
    mask = jax.random.normal(km, (N, C, Hm, Wm), dtype=jnp.float32)

    # Conv2d(C, C, 1) + BatchNorm2d(C) affine parameters.
    conv_w = 0.3 * jax.random.normal(kw, (C, C, 1, 1), dtype=jnp.float32)
    conv_b = 0.1 * jax.random.normal(kb, (C,), dtype=jnp.float32)
    gamma = 1.0 + 0.1 * jax.random.normal(kg, (C,), dtype=jnp.float32)
    beta = 0.1 * jax.random.normal(kbe, (C,), dtype=jnp.float32)

    fn = jax.jit(attention_block)
    out = jax.block_until_ready(fn(x, mask, conv_w, conv_b, gamma, beta))

    ref = reference(x, mask, conv_w, conv_b, gamma, beta)
    np.testing.assert_allclose(np.asarray(out), np.asarray(ref),
                               rtol=3e-4, atol=3e-5)

    print("KERNEL_OK")
</pallas_src>

<mosaic_0001>
module attributes {stable_mosaic.version = 11 : i64} {
  func.func @kernel(%arg0: i32, %arg1: i32, %arg2: memref<2x4x64xf32, #tpu.memory_space<vmem>>, %arg3: memref<4x4xf32, #tpu.memory_space<vmem>>, %arg4: memref<64x256xf32, #tpu.memory_space<vmem>>, %arg5: memref<4x1xf32, #tpu.memory_space<vmem>>, %arg6: memref<4x1xf32, #tpu.memory_space<vmem>>, %arg7: memref<4x1xf32, #tpu.memory_space<vmem>>, %arg8: memref<4x1xf32, #tpu.memory_space<vmem>>, %arg9: memref<4x256xf32, #tpu.memory_space<vmem>>, %arg10: memref<4x256xf32, #tpu.memory_space<vmem>>) attributes {dimension_semantics = [#tpu.dimension_semantics<arbitrary>, #tpu.dimension_semantics<arbitrary>], iteration_bounds = array<i64: 1, 1>, scalar_prefetch = 0 : i64, scratch_operands = 2 : i64, tpu.core_type = #tpu.core_type<tc>, window_params = [{transform_indices = @transform_0, window_bounds = array<i64: 2, 4, 64>}, {pipeline_mode = #tpu.pipeline_mode<synchronous>, transform_indices = @transform_1, window_bounds = array<i64: 4, 4>}, {transform_indices = @transform_2, window_bounds = array<i64: 64, 256>}, {pipeline_mode = #tpu.pipeline_mode<synchronous>, transform_indices = @transform_3, window_bounds = array<i64: 4, 1>}, {pipeline_mode = #tpu.pipeline_mode<synchronous>, transform_indices = @transform_4, window_bounds = array<i64: 4, 1>}, {pipeline_mode = #tpu.pipeline_mode<synchronous>, transform_indices = @transform_5, window_bounds = array<i64: 4, 1>}, {pipeline_mode = #tpu.pipeline_mode<synchronous>, transform_indices = @transform_6, window_bounds = array<i64: 4, 1>}]} {
    %c0_i32 = arith.constant 0 : i32
    %0 = arith.cmpi eq, %arg0, %c0_i32 : i32
    %c0_i32_0 = arith.constant 0 : i32
    %1 = arith.cmpi eq, %arg1, %c0_i32_0 : i32
    %2 = arith.andi %0, %1 : i1
    %3 = arith.extui %2 : i1 to i32
    %c0_i32_1 = arith.constant 0 : i32
    %4 = arith.cmpi ne, %3, %c0_i32_1 : i32
    scf.if %4 {
      %cst_22 = arith.constant 0.000000e+00 : f32
      %28 = vector.broadcast %cst_22 : f32 to vector<4x256xf32>
      %c0_23 = arith.constant 0 : index
      %c0_24 = arith.constant 0 : index
      %29 = vector.load %arg9[%c0_23, %c0_24] : memref<4x256xf32, #tpu.memory_space<vmem>>, vector<4x256xf32>
      tpu.vector_store %arg9[%c0_23, %c0_24], %28 {strides = array<i32>} : memref<4x256xf32, #tpu.memory_space<vmem>>, vector<4x256xf32>,
      %cst_25 = arith.constant 0.000000e+00 : f32
      %30 = vector.broadcast %cst_25 : f32 to vector<4x256xf32>
      %c0_26 = arith.constant 0 : index
      %c0_27 = arith.constant 0 : index
      %31 = vector.load %arg10[%c0_26, %c0_27] : memref<4x256xf32, #tpu.memory_space<vmem>>, vector<4x256xf32>
      tpu.vector_store %arg10[%c0_26, %c0_27], %30 {strides = array<i32>} : memref<4x256xf32, #tpu.memory_space<vmem>>, vector<4x256xf32>,
    } else {
    }
    %c0 = arith.constant 0 : index
    %c0_2 = arith.constant 0 : index
    %c0_3 = arith.constant 0 : index
    %5 = vector.load %arg2[%c0, %c0_2, %c0_3] : memref<2x4x64xf32, #tpu.memory_space<vmem>>, vector<2x4x64xf32>
    %c0_4 = arith.constant 0 : index
    %c0_5 = arith.constant 0 : index
    %6 = vector.load %arg3[%c0_4, %c0_5] : memref<4x4xf32, #tpu.memory_space<vmem>>, vector<4x4xf32>
    %c0_6 = arith.constant 0 : index
    %c0_7 = arith.constant 0 : index
    %7 = vector.load %arg4[%c0_6, %c0_7] : memref<64x256xf32, #tpu.memory_space<vmem>>, vector<64x256xf32>
    %8 = vector.shape_cast %6 : vector<4x4xf32> to vector<1x4x4xf32>
    %9 = vector.broadcast %8 : vector<1x4x4xf32> to vector<2x4x4xf32>
    %cst = arith.constant dense<0.000000e+00> : vector<2x4x64xf32>
    %10 = tpu.matmul %9, %5, %cst {dimension_numbers = #tpu.dot_dimension_numbers<[2], [1], [1], [2], [0, 0, 0, 1, 1, 2], [0], [0]>} : vector<2x4x4xf32>, vector<2x4x64xf32>, vector<2x4x64xf32> -> vector<2x4x64xf32>
    %11 = vector.shape_cast %10 : vector<2x4x64xf32> to vector<8x64xf32>
    %cst_8 = arith.constant dense<0.000000e+00> : vector<8x256xf32>
    %12 = tpu.matmul %11, %7, %cst_8 {dimension_numbers = #tpu.dot_dimension_numbers<[1], [0], [0], [1], [0, 0, 1, 1], [], []>} : vector<8x64xf32>, vector<64x256xf32>, vector<8x256xf32> -> vector<8x256xf32>
    %13 = vector.shape_cast %12 : vector<8x256xf32> to vector<2x4x256xf32>
    %c0_9 = arith.constant 0 : index
    %c0_10 = arith.constant 0 : index
    %14 = vector.load %arg9[%c0_9, %c0_10] : memref<4x256xf32, #tpu.memory_space<vmem>>, vector<4x256xf32>
    %cst_11 = arith.constant dense<0.000000e+00> : vector<4x256xf32>
    %15 = vector.multi_reduction <add>, %13, %cst_11 [0] : vector<2x4x256xf32> to vector<4x256xf32>
    %16 = arith.addf %14, %15 : vector<4x256xf32>
    %c0_12 = arith.constant 0 : index
    %c0_13 = arith.constant 0 : index
    %17 = vector.load %arg9[%c0_12, %c0_13] : memref<4x256xf32, #tpu.memory_space<vmem>>, vector<4x256xf32>
    tpu.vector_store %arg9[%c0_12, %c0_13], %16 {strides = array<i32>} : memref<4x256xf32, #tpu.memory_space<vmem>>, vector<4x256xf32>,
    %c0_14 = arith.constant 0 : index
    %c0_15 = arith.constant 0 : index
    %18 = vector.load %arg10[%c0_14, %c0_15] : memref<4x256xf32, #tpu.memory_space<vmem>>, vector<4x256xf32>
    %19 = arith.mulf %13, %13 : vector<2x4x256xf32>
    %cst_16 = arith.constant dense<0.000000e+00> : vector<4x256xf32>
    %20 = vector.multi_reduction <add>, %19, %cst_16 [0] : vector<2x4x256xf32> to vector<4x256xf32>
    %21 = arith.addf %18, %20 : vector<4x256xf32>
    %c0_17 = arith.constant 0 : index
    %c0_18 = arith.constant 0 : index
    %22 = vector.load %arg10[%c0_17, %c0_18] : memref<4x256xf32, #tpu.memory_space<vmem>>, vector<4x256xf32>
    tpu.vector_store %arg10[%c0_17, %c0_18], %21 {strides = array<i32>} : memref<4x256xf32, #tpu.memory_space<vmem>>, vector<4x256xf32>,
    %c0_i32_19 = arith.constant 0 : i32
    %23 = arith.cmpi eq, %arg0, %c0_i32_19 : i32
    %c0_i32_20 = arith.constant 0 : i32
    %24 = arith.cmpi eq, %arg1, %c0_i32_20 : i32
    %25 = arith.andi %23, %24 : i1
    %26 = arith.extui %25 : i1 to i32
    %c0_i32_21 = arith.constant 0 : i32
    %27 = arith.cmpi ne, %26, %c0_i32_21 : i32
    scf.if %27 {
      %c0_22 = arith.constant 0 : index
      %c0_23 = arith.constant 0 : index
      %28 = vector.load %arg9[%c0_22, %c0_23] : memref<4x256xf32, #tpu.memory_space<vmem>>, vector<4x256xf32>
      %cst_24 = arith.constant dense<0.000000e+00> : vector<4xf32>
      %29 = vector.multi_reduction <add>, %28, %cst_24 [1] : vector<4x256xf32> to vector<4xf32>
      %30 = vector.shape_cast %29 : vector<4xf32> to vector<4x1xf32>
      %c0_25 = arith.constant 0 : index
      %c0_26 = arith.constant 0 : index
      %31 = vector.load %arg10[%c0_25, %c0_26] : memref<4x256xf32, #tpu.memory_space<vmem>>, vector<4x256xf32>
      %cst_27 = arith.constant dense<0.000000e+00> : vector<4xf32>
      %32 = vector.multi_reduction <add>, %31, %cst_27 [1] : vector<4x256xf32> to vector<4xf32>
      %33 = vector.shape_cast %32 : vector<4xf32> to vector<4x1xf32>
      %cst_28 = arith.constant 0.001953125 : f32
      %34 = vector.broadcast %cst_28 : f32 to vector<4x1xf32>
      %35 = arith.mulf %30, %34 : vector<4x1xf32>
      %cst_29 = arith.constant 0.001953125 : f32
      %36 = vector.broadcast %cst_29 : f32 to vector<4x1xf32>
      %37 = arith.mulf %33, %36 : vector<4x1xf32>
      %38 = arith.mulf %35, %35 : vector<4x1xf32>
      %39 = arith.subf %37, %38 : vector<4x1xf32>
      %c0_30 = arith.constant 0 : index
      %c0_31 = arith.constant 0 : index
      %40 = vector.load %arg5[%c0_30, %c0_31] : memref<4x1xf32, #tpu.memory_space<vmem>>, vector<4x1xf32>
      %cst_32 = arith.constant 9.99999974E-6 : f32
      %41 = vector.broadcast %cst_32 : f32 to vector<4x1xf32>
      %42 = arith.addf %39, %41 : vector<4x1xf32>
      %43 = math.rsqrt %42 : vector<4x1xf32>
      %44 = arith.mulf %40, %43 : vector<4x1xf32>
      %c0_33 = arith.constant 0 : index
      %c0_34 = arith.constant 0 : index
      %45 = vector.load %arg7[%c0_33, %c0_34] : memref<4x1xf32, #tpu.memory_space<vmem>>, vector<4x1xf32>
      tpu.vector_store %arg7[%c0_33, %c0_34], %44 {strides = array<i32>} : memref<4x1xf32, #tpu.memory_space<vmem>>, vector<4x1xf32>,
      %c0_35 = arith.constant 0 : index
      %c0_36 = arith.constant 0 : index
      %46 = vector.load %arg6[%c0_35, %c0_36] : memref<4x1xf32, #tpu.memory_space<vmem>>, vector<4x1xf32>
      %47 = arith.mulf %35, %44 : vector<4x1xf32>
      %48 = arith.subf %46, %47 : vector<4x1xf32>
      %c0_37 = arith.constant 0 : index
      %c0_38 = arith.constant 0 : index
      %49 = vector.load %arg8[%c0_37, %c0_38] : memref<4x1xf32, #tpu.memory_space<vmem>>, vector<4x1xf32>
      tpu.vector_store %arg8[%c0_37, %c0_38], %48 {strides = array<i32>} : memref<4x1xf32, #tpu.memory_space<vmem>>, vector<4x1xf32>,
    } else {
    }
    return
  }
  func.func @transform_0(%arg0: i32, %arg1: i32) -> (i32, i32, i32) {
    %c0_i32 = arith.constant 0 : i32
    %c0_i32_0 = arith.constant 0 : i32
    %c0_i32_1 = arith.constant 0 : i32
    return %arg0, %c0_i32, %c0_i32_0 : i32, i32, i32
  }
  func.func @transform_1(%arg0: i32, %arg1: i32) -> (i32, i32) {
    %c0_i32 = arith.constant 0 : i32
    %c0_i32_0 = arith.constant 0 : i32
    %c0_i32_1 = arith.constant 0 : i32
    return %c0_i32, %c0_i32_0 : i32, i32
  }
  func.func @transform_2(%arg0: i32, %arg1: i32) -> (i32, i32) {
    %c0_i32 = arith.constant 0 : i32
    %c0_i32_0 = arith.constant 0 : i32
    return %c0_i32, %arg1 : i32, i32
  }
  func.func @transform_3(%arg0: i32, %arg1: i32) -> (i32, i32) {
    %c0_i32 = arith.constant 0 : i32
    %c0_i32_0 = arith.constant 0 : i32
    %c0_i32_1 = arith.constant 0 : i32
    return %c0_i32, %c0_i32_0 : i32, i32
  }
  func.func @transform_4(%arg0: i32, %arg1: i32) -> (i32, i32) {
    %c0_i32 = arith.constant 0 : i32
    %c0_i32_0 = arith.constant 0 : i32
    %c0_i32_1 = arith.constant 0 : i32
    return %c0_i32, %c0_i32_0 : i32, i32
  }
  func.func @transform_5(%arg0: i32, %arg1: i32) -> (i32, i32) {
    %c0_i32 = arith.constant 0 : i32
    %c0_i32_0 = arith.constant 0 : i32
    %c0_i32_1 = arith.constant 0 : i32
    return %c0_i32, %c0_i32_0 : i32, i32
  }
  func.func @transform_6(%arg0: i32, %arg1: i32) -> (i32, i32) {
    %c0_i32 = arith.constant 0 : i32
    %c0_i32_0 = arith.constant 0 : i32
    %c0_i32_1 = arith.constant 0 : i32
    return %c0_i32, %c0_i32_0 : i32, i32
  }
}

module attributes {stable_mosaic.version = 11 : i64} {
  func.func @kernel(%arg0: i32, %arg1: i32, %arg2: memref<2x4x256xf32, #tpu.memory_space<vmem>>, %arg3: memref<2x4x64xf32, #tpu.memory_space<vmem>>, %arg4: memref<4x4xf32, #tpu.memory_space<vmem>>, %arg5: memref<64x256xf32, #tpu.memory_space<vmem>>, %arg6: memref<4x1xf32, #tpu.memory_space<vmem>>, %arg7: memref<4x1xf32, #tpu.memory_space<vmem>>, %arg8: memref<2x4x256xf32, #tpu.memory_space<vmem>>) attributes {dimension_semantics = [#tpu.dimension_semantics<parallel>, #tpu.dimension_semantics<parallel>], iteration_bounds = array<i64: 1, 1>, scalar_prefetch = 0 : i64, scratch_operands = 0 : i64, tpu.core_type = #tpu.core_type<tc>, window_params = [{transform_indices = @transform_0, window_bounds = array<i64: 2, 4, 256>}, {transform_indices = @transform_1, window_bounds = array<i64: 2, 4, 64>}, {pipeline_mode = #tpu.pipeline_mode<synchronous>, transform_indices = @transform_2, window_bounds = array<i64: 4, 4>}, {transform_indices = @transform_3, window_bounds = array<i64: 64, 256>}, {pipeline_mode = #tpu.pipeline_mode<synchronous>, transform_indices = @transform_4, window_bounds = array<i64: 4, 1>}, {pipeline_mode = #tpu.pipeline_mode<synchronous>, transform_indices = @transform_5, window_bounds = array<i64: 4, 1>}, {transform_indices = @transform_6, window_bounds = array<i64: 2, 4, 256>}]} {
    %c0 = arith.constant 0 : index
    %c0_0 = arith.constant 0 : index
    %c0_1 = arith.constant 0 : index
    %0 = vector.load %arg3[%c0, %c0_0, %c0_1] : memref<2x4x64xf32, #tpu.memory_space<vmem>>, vector<2x4x64xf32>
    %c0_2 = arith.constant 0 : index
    %c0_3 = arith.constant 0 : index
    %1 = vector.load %arg4[%c0_2, %c0_3] : memref<4x4xf32, #tpu.memory_space<vmem>>, vector<4x4xf32>
    %c0_4 = arith.constant 0 : index
    %c0_5 = arith.constant 0 : index
    %2 = vector.load %arg5[%c0_4, %c0_5] : memref<64x256xf32, #tpu.memory_space<vmem>>, vector<64x256xf32>
    %3 = vector.shape_cast %1 : vector<4x4xf32> to vector<1x4x4xf32>
    %4 = vector.broadcast %3 : vector<1x4x4xf32> to vector<2x4x4xf32>
    %cst = arith.constant dense<0.000000e+00> : vector<2x4x64xf32>
    %5 = tpu.matmul %4, %0, %cst {dimension_numbers = #tpu.dot_dimension_numbers<[2], [1], [1], [2], [0, 0, 0, 1, 1, 2], [0], [0]>} : vector<2x4x4xf32>, vector<2x4x64xf32>, vector<2x4x64xf32> -> vector<2x4x64xf32>
    %6 = vector.shape_cast %5 : vector<2x4x64xf32> to vector<8x64xf32>
    %cst_6 = arith.constant dense<0.000000e+00> : vector<8x256xf32>
    %7 = tpu.matmul %6, %2, %cst_6 {dimension_numbers = #tpu.dot_dimension_numbers<[1], [0], [0], [1], [0, 0, 1, 1], [], []>} : vector<8x64xf32>, vector<64x256xf32>, vector<8x256xf32> -> vector<8x256xf32>
    %8 = vector.shape_cast %7 : vector<8x256xf32> to vector<2x4x256xf32>
    %c0_7 = arith.constant 0 : index
    %c0_8 = arith.constant 0 : index
    %9 = vector.load %arg6[%c0_7, %c0_8] : memref<4x1xf32, #tpu.memory_space<vmem>>, vector<4x1xf32>
    %10 = vector.shape_cast %9 : vector<4x1xf32> to vector<1x4x1xf32>
    %11 = vector.broadcast %10 : vector<1x4x1xf32> to vector<2x4x256xf32>
    %12 = arith.mulf %8, %11 : vector<2x4x256xf32>
    %c0_9 = arith.constant 0 : index
    %c0_10 = arith.constant 0 : index
    %13 = vector.load %arg7[%c0_9, %c0_10] : memref<4x1xf32, #tpu.memory_space<vmem>>, vector<4x1xf32>
    %14 = vector.shape_cast %13 : vector<4x1xf32> to vector<1x4x1xf32>
    %15 = vector.broadcast %14 : vector<1x4x1xf32> to vector<2x4x256xf32>
    %16 = arith.addf %12, %15 : vector<2x4x256xf32>
    %17 = arith.negf %16 : vector<2x4x256xf32>
    %18 = math.exp %17 : vector<2x4x256xf32>
    %cst_11 = arith.constant 1.000000e+00 : f32
    %19 = vector.broadcast %cst_11 : f32 to vector<2x4x256xf32>
    %20 = arith.addf %19, %18 : vector<2x4x256xf32>
    %21 = arith.divf %19, %20 : vector<2x4x256xf32>
    %c0_12 = arith.constant 0 : index
    %c0_13 = arith.constant 0 : index
    %c0_14 = arith.constant 0 : index
    %22 = vector.load %arg2[%c0_12, %c0_13, %c0_14] : memref<2x4x256xf32, #tpu.memory_space<vmem>>, vector<2x4x256xf32>
    %23 = arith.mulf %22, %21 : vector<2x4x256xf32>
    %c0_15 = arith.constant 0 : index
    %c0_16 = arith.constant 0 : index
    %c0_17 = arith.constant 0 : index
    %24 = vector.load %arg8[%c0_15, %c0_16, %c0_17] : memref<2x4x256xf32, #tpu.memory_space<vmem>>, vector<2x4x256xf32>
    tpu.vector_store %arg8[%c0_15, %c0_16, %c0_17], %23 {strides = array<i32>} : memref<2x4x256xf32, #tpu.memory_space<vmem>>, vector<2x4x256xf32>,
    return
  }
  func.func @transform_0(%arg0: i32, %arg1: i32) -> (i32, i32, i32) {
    %c0_i32 = arith.constant 0 : i32
    %c0_i32_0 = arith.constant 0 : i32
    return %arg0, %c0_i32, %arg1 : i32, i32, i32
  }
  func.func @transform_1(%arg0: i32, %arg1: i32) -> (i32, i32, i32) {
    %c0_i32 = arith.constant 0 : i32
    %c0_i32_0 = arith.constant 0 : i32
    %c0_i32_1 = arith.constant 0 : i32
    return %arg0, %c0_i32, %c0_i32_0 : i32, i32, i32
  }
  func.func @transform_2(%arg0: i32, %arg1: i32) -> (i32, i32) {
    %c0_i32 = arith.constant 0 : i32
    %c0_i32_0 = arith.constant 0 : i32
    %c0_i32_1 = arith.constant 0 : i32
    return %c0_i32, %c0_i32_0 : i32, i32
  }
  func.func @transform_3(%arg0: i32, %arg1: i32) -> (i32, i32) {
    %c0_i32 = arith.constant 0 : i32
    %c0_i32_0 = arith.constant 0 : i32
    return %c0_i32, %arg1 : i32, i32
  }
  func.func @transform_4(%arg0: i32, %arg1: i32) -> (i32, i32) {
    %c0_i32 = arith.constant 0 : i32
    %c0_i32_0 = arith.constant 0 : i32
    %c0_i32_1 = arith.constant 0 : i32
    return %c0_i32, %c0_i32_0 : i32, i32
  }
  func.func @transform_5(%arg0: i32, %arg1: i32) -> (i32, i32) {
    %c0_i32 = arith.constant 0 : i32
    %c0_i32_0 = arith.constant 0 : i32
    %c0_i32_1 = arith.constant 0 : i32
    return %c0_i32, %c0_i32_0 : i32, i32
  }
  func.func @transform_6(%arg0: i32, %arg1: i32) -> (i32, i32, i32) {
    %c0_i32 = arith.constant 0 : i32
    %c0_i32_0 = arith.constant 0 : i32
    return %arg0, %c0_i32, %arg1 : i32, i32, i32
  }
}

</mosaic_0001>

<llo_original>
// kernel: attention_block.3
$region0: #{attention_block.3}
  #allocation0 [shape = 'u32[]', space=smem, size = 0x4, offset = 0x4, fixed_abs, tag = 'smem constant byte address 0x4 - core index']
  #allocation1 [shape = 'u32[144,128]{1,0:T(1,128)}', space=vmem, size = 0x12000, scoped, tag = 'internal scratch']
  %s0 = inlined_call_operand.vmem [shape: f32[2,4,256], index: 0, kind: input, shape index: {}]
  %s1 = inlined_call_operand.vmem [shape: f32[2,4,64], index: 1, kind: input, shape index: {}]
  %s2 = inlined_call_operand.vmem [shape: f32[4,4], index: 2, kind: input, shape index: {}]
  %s3 = inlined_call_operand.vmem [shape: f32[64,256], index: 3, kind: input, shape index: {}]
  %s4 = inlined_call_operand.vmem [shape: f32[4,1], index: 4, kind: input, shape index: {}]
  %s5 = inlined_call_operand.vmem [shape: f32[4,1], index: 5, kind: input, shape index: {}]
  %s6 = inlined_call_operand.vmem [shape: f32[2,4,256], index: 6, kind: output, shape index: {}]
  %s7 = sld [smem:[#allocation0]]
  $region34: #{attention_block.3} parent=0
    _
  %s9 = ssub.s32 1, %s7
  %s10 = scalar_select 0, %s9, %s7
  // Predicated region
  $region2: #{attention_block.3} parent=0 // pred_check
    _
  $region3: #{attention_block.3} parent=0 // pred_check_branch
    %12 = sbr.rel (0) target = $region5
  $region4: #{attention_block.3} parent=0 // pred_region
    _
  $region5: #{attention_block.3} parent=0 // pred_fallthru
    _
  // Predicated region
  $region6: #{attention_block.3} parent=0 // pred_check
    _
  $region7: #{attention_block.3} parent=0 // pred_check_branch
    %14 = sbr.rel (0) target = $region9
  $region8: #{attention_block.3} parent=0 // pred_region
    _
  $region9: #{attention_block.3} parent=0 // pred_fallthru
    _
  // Predicated region
  $region10: #{attention_block.3} parent=0 // pred_check
    _
  $region11: #{attention_block.3} parent=0 // pred_check_branch
    %16 = sbr.rel (0) target = $region13
  $region12: #{attention_block.3} parent=0 // pred_region
    _
  $region13: #{attention_block.3} parent=0 // pred_fallthru
    _
  // Predicated region
  $region14: #{attention_block.3} parent=0 // pred_check
    _
  $region15: #{attention_block.3} parent=0 // pred_check_branch
    %18 = sbr.rel (0) target = $region17
  $region16: #{attention_block.3} parent=0 // pred_region
    _
  $region17: #{attention_block.3} parent=0 // pred_fallthru
    _
  // Predicated region
  $region18: #{attention_block.3} parent=0 // pred_check
    _
  $region19: #{attention_block.3} parent=0 // pred_check_branch
    %20 = sbr.rel (0) target = $region21
  $region20: #{attention_block.3} parent=0 // pred_region
    _
  $region21: #{attention_block.3} parent=0 // pred_fallthru
    _
  // Predicated region
  $region22: #{attention_block.3} parent=0 // pred_check
    _
  $region23: #{attention_block.3} parent=0 // pred_check_branch
    %22 = sbr.rel (0) target = $region25
  $region24: #{attention_block.3} parent=0 // pred_region
    _
  $region25: #{attention_block.3} parent=0 // pred_fallthru
    _
  %v23 = vld [vmem:[%s1] sm:$0xf]
  %v24 = vld [vmem:[%s1 + $0x4] sm:$0xf]
  %v25 = vld [vmem:[%s2] sm:$0xf]
  %v26 = vld [vmem:[%s3] sm:$0xff]
  %v27 = vld [vmem:[%s3 + $0x8] sm:$0xff]
  %v28 = vld [vmem:[%s3 + $0x10] sm:$0xff]
  %v29 = vld [vmem:[%s3 + $0x18] sm:$0xff]
  %v30 = vld [vmem:[%s3 + $0x20] sm:$0xff]
  %v31 = vld [vmem:[%s3 + $0x28] sm:$0xff]
  %v32 = vld [vmem:[%s3 + $0x30] sm:$0xff]
  %v33 = vld [vmem:[%s3 + $0x38] sm:$0xff]
  %v34 = vld [vmem:[%s3 + $0x40] sm:$0xff]
  %v35 = vld [vmem:[%s3 + $0x48] sm:$0xff]
  %v36 = vld [vmem:[%s3 + $0x50] sm:$0xff]
  %v37 = vld [vmem:[%s3 + $0x58] sm:$0xff]
  %v38 = vld [vmem:[%s3 + $0x60] sm:$0xff]
  %v39 = vld [vmem:[%s3 + $0x68] sm:$0xff]
  %v40 = vld [vmem:[%s3 + $0x70] sm:$0xff]
  %v41 = vld [vmem:[%s3 + $0x78] sm:$0xff]
  %vm42 = vcmask 31744
  %v44 = vsel %vm42, %v25, 0
  %vm46 = vcmask 1043456
  %v48 = vsel %vm46, %v23, 0
  %50 = vmatprep.subr.mxu0 0.0
  %51 = vmatpush1.msra.mxu0 0.0
  %52 = vmatprep.subr.mxu0 0.0
  %53 = vmatpush1.msra.mxu0 0.0
  %54 = vmatprep.subr.mxu0 0.0
  %55 = vmatpush1.msra.mxu0 0.0
  %56 = vmatprep.subr.mxu0 0.0
  %57 = vmatpush1.msra.mxu0 0.0
  %58 = vmatprep.subr.mxu0 0.0
  %59 = vmatpush1.msra.mxu0 0.0
  %60 = vmatprep.subr.mxu0 0.0
  %61 = vmatpush1.msra.mxu0 0.0
  %62 = vmatprep.subr.mxu0 0.0
  %63 = vmatpush1.msra.mxu0 0.0
  %64 = vmatprep.subr.mxu0 0.0
  %65 = vmatpush1.msra.mxu0 0.0
  %66 = vmatprep.subr.mxu0 0.0
  %67 = vmatpush1.msra.mxu0 0.0
  %68 = vmatprep.subr.mxu0 0.0
  %69 = vmatpush1.msra.mxu0 0.0
  %70 = vmatprep.subr.mxu0 0.0
  %71 = vmatpush1.msra.mxu0 0.0
  %72 = vmatprep.subr.mxu0 0.0
  %73 = vmatpush1.msra.mxu0 0.0
  %74 = vmatprep.subr.mxu0 0.0
  %75 = vmatpush1.msra.mxu0 0.0
  %76 = vmatprep.subr.mxu0 0.0
  %77 = vmatpush1.msra.mxu0 0.0
  %78 = vmatprep.subr.mxu0 0.0
  %79 = vmatpush1.msra.mxu0 0.0
  %80 = vmatprep.subr.mxu0 0.0
  %81 = vmatpush1.msra.mxu0 %v48
  %82 = vmatprep.subr.mxu0 0.0
  %83 = vmatpush2.msra.mxu0 0.0
  %84 = vmatprep.subr.mxu0 0.0
  %85 = vmatpush2.msra.mxu0 0.0
  %86 = vmatprep.subr.mxu0 0.0
  %87 = vmatpush2.msra.mxu0 0.0
  %88 = vmatprep.subr.mxu0 0.0
  %89 = vmatpush2.msra.mxu0 0.0
  %90 = vmatprep.subr.mxu0 0.0
  %91 = vmatpush2.msra.mxu0 0.0
  %92 = vmatprep.subr.mxu0 0.0
  %93 = vmatpush2.msra.mxu0 0.0
  %94 = vmatprep.subr.mxu0 0.0
  %95 = vmatpush2.msra.mxu0 0.0
  %96 = vmatprep.subr.mxu0 0.0
  %97 = vmatpush2.msra.mxu0 0.0
  %98 = vmatprep.subr.mxu0 0.0
  %99 = vmatpush2.msra.mxu0 0.0
  %100 = vmatprep.subr.mxu0 0.0
  %101 = vmatpush2.msra.mxu0 0.0
  %102 = vmatprep.subr.mxu0 0.0
  %103 = vmatpush2.msra.mxu0 0.0
  %104 = vmatprep.subr.mxu0 0.0
  %105 = vmatpush2.msra.mxu0 0.0
  %106 = vmatprep.subr.mxu0 0.0
  %107 = vmatpush2.msra.mxu0 0.0
  %108 = vmatprep.subr.mxu0 0.0
  %109 = vmatpush2.msra.mxu0 0.0
  %110 = vmatprep.subr.mxu0 0.0
  %111 = vmatpush2.msra.mxu0 0.0
  %112 = vmatprep.subr.mxu0 0.0
  %113 = vmatpush2.msra.mxu0 0.0
  %114 = vmatprep.mubr.f32.mxu0 0.0
  %115 = vmatmul.mubr.f32.gmra.mxu0 %v44
  %v116 = vpop.f32.mrf.mxu0
  %v117 = vadd.f32 0.0, %v116
  %v118 = vpop.f32.mrf.mxu0
  %119 = vdwg.mxu0
  %v121 = vsel %vm46, %v24, 0
  %123 = vmatprep.subr.mxu0 0.0
  %124 = vmatpush1.msra.mxu0 0.0
  %125 = vmatprep.subr.mxu0 0.0
  %126 = vmatpush1.msra.mxu0 0.0
  %127 = vmatprep.subr.mxu0 0.0
  %128 = vmatpush1.msra.mxu0 0.0
  %129 = vmatprep.subr.mxu0 0.0
  %130 = vmatpush1.msra.mxu0 0.0
  %131 = vmatprep.subr.mxu0 0.0
  %132 = vmatpush1.msra.mxu0 0.0
  %133 = vmatprep.subr.mxu0 0.0
  %134 = vmatpush1.msra.mxu0 0.0
  %135 = vmatprep.subr.mxu0 0.0
  %136 = vmatpush1.msra.mxu0 0.0
  %137 = vmatprep.subr.mxu0 0.0
  %138 = vmatpush1.msra.mxu0 0.0
  %139 = vmatprep.subr.mxu0 0.0
  %140 = vmatpush1.msra.mxu0 0.0
  %141 = vmatprep.subr.mxu0 0.0
  %142 = vmatpush1.msra.mxu0 0.0
  %143 = vmatprep.subr.mxu0 0.0
  %144 = vmatpush1.msra.mxu0 0.0
  %145 = vmatprep.subr.mxu0 0.0
  %146 = vmatpush1.msra.mxu0 0.0
  %147 = vmatprep.subr.mxu0 0.0
  %148 = vmatpush1.msra.mxu0 0.0
  %149 = vmatprep.subr.mxu0 0.0
  %150 = vmatpush1.msra.mxu0 0.0
  %151 = vmatprep.subr.mxu0 0.0
  %152 = vmatpush1.msra.mxu0 0.0
  %153 = vmatprep.subr.mxu0 0.0
  %154 = vmatpush1.msra.mxu0 %v121
  %155 = vmatprep.subr.mxu0 0.0
  %156 = vmatpush2.msra.mxu0 0.0
  %157 = vmatprep.subr.mxu0 0.0
  %158 = vmatpush2.msra.mxu0 0.0
  %159 = vmatprep.subr.mxu0 0.0
  %160 = vmatpush2.msra.mxu0 0.0
  %161 = vmatprep.subr.mxu0 0.0
  %162 = vmatpush2.msra.mxu0 0.0
  %163 = vmatprep.subr.mxu0 0.0
  %164 = vmatpush2.msra.mxu0 0.0
  %165 = vmatprep.subr.mxu0 0.0
  %166 = vmatpush2.msra.mxu0 0.0
  %167 = vmatprep.subr.mxu0 0.0
  %168 = vmatpush2.msra.mxu0 0.0
  %169 = vmatprep.subr.mxu0 0.0
  %170 = vmatpush2.msra.mxu0 0.0
  %171 = vmatprep.subr.mxu0 0.0
  %172 = vmatpush2.msra.mxu0 0.0
  %173 = vmatprep.subr.mxu0 0.0
  %174 = vmatpush2.msra.mxu0 0.0
  %175 = vmatprep.subr.mxu0 0.0
  %176 = vmatpush2.msra.mxu0 0.0
  %177 = vmatprep.subr.mxu0 0.0
  %178 = vmatpush2.msra.mxu0 0.0
  %179 = vmatprep.subr.mxu0 0.0
  %180 = vmatpush2.msra.mxu0 0.0
  %181 = vmatprep.subr.mxu0 0.0
  %182 = vmatpush2.msra.mxu0 0.0
  %183 = vmatprep.subr.mxu0 0.0
  %184 = vmatpush2.msra.mxu0 0.0
  %185 = vmatprep.subr.mxu0 0.0
  %186 = vmatpush2.msra.mxu0 0.0
  %187 = vmatprep.mubr.f32.mxu0 0.0
  %188 = vmatmul.mubr.f32.gmra.mxu0 %v44
  %v189 = vpop.f32.mrf.mxu0
  %v190 = vadd.f32 0.0, %v189
  %v191 = vpop.f32.mrf.mxu0
  %192 = vdwg.mxu0
  %v195 = vcombine.low %v117, %v190
  %vm196 = vcmask 523264
  %v197 = vsel %vm196, %v195, 0
  %199 = vmatprep.subr.mxu0 0.0
  %200 = vmatpush1.msra.mxu0 0.0
  %201 = vmatprep.subr.mxu0 0.0
  %202 = vmatpush1.msra.mxu0 0.0
  %203 = vmatprep.subr.mxu0 0.0
  %204 = vmatpush1.msra.mxu0 0.0
  %205 = vmatprep.subr.mxu0 0.0
  %206 = vmatpush1.msra.mxu0 0.0
  %207 = vmatprep.subr.mxu0 0.0
  %208 = vmatpush1.msra.mxu0 0.0
  %209 = vmatprep.subr.mxu0 0.0
  %210 = vmatpush1.msra.mxu0 0.0
  %211 = vmatprep.subr.mxu0 0.0
  %212 = vmatpush1.msra.mxu0 0.0
  %213 = vmatprep.subr.mxu0 0.0
  %214 = vmatpush1.msra.mxu0 0.0
  %215 = vmatprep.subr.mxu0 %v41
  %216 = vmatpush1.msra.mxu0 %v40
  %217 = vmatprep.subr.mxu0 %v39
  %218 = vmatpush1.msra.mxu0 %v38
  %219 = vmatprep.subr.mxu0 %v37
  %220 = vmatpush1.msra.mxu0 %v36
  %221 = vmatprep.subr.mxu0 %v35
  %222 = vmatpush1.msra.mxu0 %v34
  %223 = vmatprep.subr.mxu0 %v33
  %224 = vmatpush1.msra.mxu0 %v32
  %225 = vmatprep.subr.mxu0 %v31
  %226 = vmatpush1.msra.mxu0 %v30
  %227 = vmatprep.subr.mxu0 %v29
  %228 = vmatpush1.msra.mxu0 %v28
  %229 = vmatprep.subr.mxu0 %v27
  %230 = vmatpush1.msra.mxu0 %v26
  %231 = vmatprep.subr.mxu0 0.0
  %232 = vmatpush2.msra.mxu0 0.0
  %233 = vmatprep.subr.mxu0 0.0
  %234 = vmatpush2.msra.mxu0 0.0
  %235 = vmatprep.subr.mxu0 0.0
  %236 = vmatpush2.msra.mxu0 0.0
  %237 = vmatprep.subr.mxu0 0.0
  %238 = vmatpush2.msra.mxu0 0.0
  %239 = vmatprep.subr.mxu0 0.0
  %240 = vmatpush2.msra.mxu0 0.0
  %241 = vmatprep.subr.mxu0 0.0
  %242 = vmatpush2.msra.mxu0 0.0
  %243 = vmatprep.subr.mxu0 0.0
  %244 = vmatpush2.msra.mxu0 0.0
  %245 = vmatprep.subr.mxu0 0.0
  %246 = vmatpush2.msra.mxu0 0.0
  %247 = vmatprep.subr.mxu0 0.0
  %248 = vmatpush2.msra.mxu0 0.0
  %249 = vmatprep.subr.mxu0 0.0
  %250 = vmatpush2.msra.mxu0 0.0
  %251 = vmatprep.subr.mxu0 0.0
  %252 = vmatpush2.msra.mxu0 0.0
  %253 = vmatprep.subr.mxu0 0.0
  %254 = vmatpush2.msra.mxu0 0.0
  %255 = vmatprep.subr.mxu0 0.0
  %256 = vmatpush2.msra.mxu0 0.0
  %257 = vmatprep.subr.mxu0 0.0
  %258 = vmatpush2.msra.mxu0 0.0
  %259 = vmatprep.subr.mxu0 0.0
  %260 = vmatpush2.msra.mxu0 0.0
  %261 = vmatprep.subr.mxu0 0.0
  %262 = vmatpush2.msra.mxu0 0.0
  %263 = vmatprep.mubr.f32.mxu0 0.0
  %264 = vmatmul.mubr.f32.gmra.mxu0 %v197
  %v265 = vpop.f32.mrf.mxu0
  %v266 = vadd.f32 0.0, %v265
  %v267 = vpop.f32.mrf.mxu0
  %v268 = vadd.f32 0.0, %v267
  %269 = vdwg.mxu0
  %v272 = vcombine.low %v266, %v268
  %v273 = vcombine.high %v266, %v268
  %v276 = vld [vmem:[%s4] sm:$0xf]
  %278 = vset.pattern.permute.xlu0 0
  %279 = vperm.xlu0 %278, %v276
  %v280 = vpop.permute.xlu0 %279
  %v282 = vunpack.c.l.s4 839922192
  %v283 = vunpack.c.0.s8 %v282
  %v284 = vlaneseq
  %v285 = vshrl.u32 %v284, 7
  %v286 = vsub.s32 %v283, %v285
  %v287 = vrot.slane %v280, %v286
  %v289 = vmul.f32 %v272, %v287
  %v290 = vmul.f32 %v273, %v287
  %v291 = vld [vmem:[%s5] sm:$0xf]
  %293 = vset.pattern.permute.xlu0 0
  %294 = vperm.xlu0 %293, %v291
  %v295 = vpop.permute.xlu0 %294
  %v297 = vunpack.c.l.s4 839922192
  %v298 = vunpack.c.0.s8 %v297
  %v299 = vlaneseq
  %v300 = vshrl.u32 %v299, 7
  %v301 = vsub.s32 %v298, %v300
  %v302 = vrot.slane %v295, %v301
  %v304 = vadd.f32 %v289, %v302
  %v305 = vadd.f32 %v290, %v302
  %v306 = vxor.u32 %v304, 2147483648
  %v307 = vxor.u32 %v305, 2147483648
  %v308 = vmul.f32 %v306, 1.442695
  %v309 = vpow.pop %v308
  %v310 = vmul.f32 %v307, 1.442695
  %v311 = vpow.pop %v310
  %v312 = vadd.f32 %v309, 1.0
  %v313 = vadd.f32 %v311, 1.0
  %v314 = vrcp.pop %v312
  %v315 = vmul.f32 1.0, %v314
  %v316 = vrcp.pop %v313
  %v317 = vmul.f32 1.0, %v316
  %v318 = vld [vmem:[%s0] sm:$0xff]
  %v319 = vld [vmem:[%s0 + $0x8] sm:$0xff]
  %v320 = vmul.f32 %v318, %v315
  %v321 = vmul.f32 %v319, %v317
  %322 = vst [vmem:[%s6] sm:$0xff] %v320
  %323 = vst [vmem:[%s6 + $0x8] sm:$0xff] %v321
  // Predicated region
  $region26: #{attention_block.3} parent=0 // pred_check
    _
  $region27: #{attention_block.3} parent=0 // pred_check_branch
    %325 = sbr.rel (0) target = $region29
  $region28: #{attention_block.3} parent=0 // pred_region
    _
  $region29: #{attention_block.3} parent=0 // pred_fallthru
    _
  // Predicated region
  $region30: #{attention_block.3} parent=0 // pred_check
    _
  $region31: #{attention_block.3} parent=0 // pred_check_branch
    %327 = sbr.rel (0) target = $region33
  $region32: #{attention_block.3} parent=0 // pred_region
    _
  $region33: #{attention_block.3} parent=0 // pred_fallthru
    _

// kernel: attention_block.2
$region0: #{attention_block.2}
  #allocation0 [shape = 'u32[]', space=smem, size = 0x4, offset = 0x4, fixed_abs, tag = 'smem constant byte address 0x4 - core index']
  #allocation1 [shape = 'u32[144,128]{1,0:T(1,128)}', space=vmem, size = 0x12000, scoped, tag = 'internal scratch']
  #allocation2 [shape = 'f32[4,256]{1,0:T(4,128)}', space=vmem, size = 0x1000, scoped, tag = 'scratch operand']
  #allocation3 [shape = 'f32[4,256]{1,0:T(4,128)}', space=vmem, size = 0x1000, scoped, tag = 'scratch operand']
  %s0 = inlined_call_operand.vmem [shape: f32[2,4,64], index: 0, kind: input, shape index: {}]
  %s1 = inlined_call_operand.vmem [shape: f32[4,4], index: 1, kind: input, shape index: {}]
  %s2 = inlined_call_operand.hbm [shape: f32[64,256], index: 2, kind: input, shape index: {}]
  %s3 = inlined_call_operand.vmem [shape: f32[4,1], index: 3, kind: input, shape index: {}]
  %s4 = inlined_call_operand.vmem [shape: f32[4,1], index: 4, kind: input, shape index: {}]
  %s5 = inlined_call_operand.vmem [shape: f32[4,1], index: 5, kind: output, shape index: {0}]
  %s6 = inlined_call_operand.vmem [shape: f32[4,1], index: 6, kind: output, shape index: {1}]
  %7 = xla_tuple %s5, %s6
  %s8 = sld [smem:[#allocation0]]
  $region50: #{attention_block.2} parent=0
    _
  %s10 = ssub.s32 1, %s8
  %s11 = scalar_select 0, %s10, %s8
  $region1: #{attention_block.2} parent=0
    #allocation4 [shape = 'u8[65536]{0}', space=vmem, size = 0x10000, scoped, tag = 'input window, operand 2, single buffered']
    #allocation5 [shape = 's32[1]{0}', space=sflag, size = 0x4, scoped, tag = 'scoped memory for attention_block.2']
    %12 = vsyncpa [#allocation5], 0
    // Predicated region
    $region2: #{attention_block.2} parent=1 // pred_check
      _
    $region3: #{attention_block.2} parent=1 // pred_check_branch
      %14 = sbr.rel (0) target = $region5
    $region4: #{attention_block.2} parent=1 // pred_region
      _
    $region5: #{attention_block.2} parent=1 // pred_fallthru
      _
    // Predicated region
    $region6: #{attention_block.2} parent=1 // pred_check
      _
    $region7: #{attention_block.2} parent=1 // pred_check_branch
      %16 = sbr.rel (0) target = $region9
    $region8: #{attention_block.2} parent=1 // pred_region
      _
    $region9: #{attention_block.2} parent=1 // pred_fallthru
      _
    // Predicated region
    $region10: #{attention_block.2} parent=1 // pred_check
      _
    $region11: #{attention_block.2} parent=1 // pred_check_branch
      %18 = sbr.rel (0) target = $region13
    $region12: #{attention_block.2} parent=1 // pred_region
      %s20 = ssub.s32 2048, 2048
      %21 = vsyncadd [#allocation5], %s20
      %s22 = sshll.u32 [#allocation4], 4
      %s23 = int_to_ptr.vmem [resolvable:$true] %s22
      %28 = dma.hbm_to_vmem [thread:$0]  %s2, 2048, %s23, [#allocation5], 256, 256, 16
    $region13: #{attention_block.2} parent=1 // pred_fallthru
      _
    // Predicated region
    $region14: #{attention_block.2} parent=1 // pred_check
      _
    $region15: #{attention_block.2} parent=1 // pred_check_branch
      %30 = sbr.rel (0) target = $region17
    $region16: #{attention_block.2} parent=1 // pred_region
      _
    $region17: #{attention_block.2} parent=1 // pred_fallthru
      _
    // Predicated region
    $region18: #{attention_block.2} parent=1 // pred_check
      _
    $region19: #{attention_block.2} parent=1 // pred_check_branch
      %32 = sbr.rel (0) target = $region21
    $region20: #{attention_block.2} parent=1 // pred_region
      _
    $region21: #{attention_block.2} parent=1 // pred_fallthru
      _
    // Predicated region
    $region22: #{attention_block.2} parent=1 // pred_check
      _
    $region23: #{attention_block.2} parent=1 // pred_check_branch
      %34 = sbr.rel (0) target = $region25
    $region24: #{attention_block.2} parent=1 // pred_region
      %35 = dma.done [#allocation5], 2048
    $region25: #{attention_block.2} parent=1 // pred_fallthru
      _
    %p36 = scmp.eq.s32.totalorder 0, 0
    %p37 = scmp.eq.s32.totalorder 0, 0
    %p38 = pnand %p36, %p37
    %p39 = pneg %p38
    // Predicated region
    $region26: #{attention_block.2} parent=1 // pred_check
      _
    $region27: #{attention_block.2} parent=1 // pred_check_branch
      %41 = sbr.rel (%p38) target = $region29
    $region28: #{attention_block.2} parent=1 // pred_region
      %42 = vst [vmem:[#allocation2] sm:$0xff] 0.0
      %43 = vst [vmem:[#allocation3] sm:$0xff] 0.0
    $region29: #{attention_block.2} parent=1 // pred_fallthru
      _
    %v44 = vld [vmem:[%s0] sm:$0xf]
    %v45 = vld [vmem:[%s0 + $0x4] sm:$0xf]
    %v46 = vld [vmem:[%s1] sm:$0xf]
    %v47 = vld [vmem:[#allocation4] sm:$0xff]
    %v48 = vld [vmem:[#allocation4 + $0x8] sm:$0xff]
    %v49 = vld [vmem:[#allocation4 + $0x10] sm:$0xff]
    %v50 = vld [vmem:[#allocation4 + $0x18] sm:$0xff]
    %v51 = vld [vmem:[#allocation4 + $0x20] sm:$0xff]
    %v52 = vld [vmem:[#allocation4 + $0x28] sm:$0xff]
    %v53 = vld [vmem:[#allocation4 + $0x30] sm:$0xff]
    %v54 = vld [vmem:[#allocation4 + $0x38] sm:$0xff]
    %v55 = vld [vmem:[#allocation4 + $0x40] sm:$0xff]
    %v56 = vld [vmem:[#allocation4 + $0x48] sm:$0xff]
    %v57 = vld [vmem:[#allocation4 + $0x50] sm:$0xff]
    %v58 = vld [vmem:[#allocation4 + $0x58] sm:$0xff]
    %v59 = vld [vmem:[#allocation4 + $0x60] sm:$0xff]
    %v60 = vld [vmem:[#allocation4 + $0x68] sm:$0xff]
    %v61 = vld [vmem:[#allocation4 + $0x70] sm:$0xff]
    %v62 = vld [vmem:[#allocation4 + $0x78] sm:$0xff]
    %vm63 = vcmask 31744
    %v65 = vsel %vm63, %v46, 0
    %vm67 = vcmask 1043456
    %v69 = vsel %vm67, %v44, 0
    %71 = vmatprep.subr.mxu0 0.0
    %72 = vmatpush1.msra.mxu0 0.0
    %73 = vmatprep.subr.mxu0 0.0
    %74 = vmatpush1.msra.mxu0 0.0
    %75 = vmatprep.subr.mxu0 0.0
    %76 = vmatpush1.msra.mxu0 0.0
    %77 = vmatprep.subr.mxu0 0.0
    %78 = vmatpush1.msra.mxu0 0.0
    %79 = vmatprep.subr.mxu0 0.0
    %80 = vmatpush1.msra.mxu0 0.0
    %81 = vmatprep.subr.mxu0 0.0
    %82 = vmatpush1.msra.mxu0 0.0
    %83 = vmatprep.subr.mxu0 0.0
    %84 = vmatpush1.msra.mxu0 0.0
    %85 = vmatprep.subr.mxu0 0.0
    %86 = vmatpush1.msra.mxu0 0.0
    %87 = vmatprep.subr.mxu0 0.0
    %88 = vmatpush1.msra.mxu0 0.0
    %89 = vmatprep.subr.mxu0 0.0
    %90 = vmatpush1.msra.mxu0 0.0
    %91 = vmatprep.subr.mxu0 0.0
    %92 = vmatpush1.msra.mxu0 0.0
    %93 = vmatprep.subr.mxu0 0.0
    %94 = vmatpush1.msra.mxu0 0.0
    %95 = vmatprep.subr.mxu0 0.0
    %96 = vmatpush1.msra.mxu0 0.0
    %97 = vmatprep.subr.mxu0 0.0
    %98 = vmatpush1.msra.mxu0 0.0
    %99 = vmatprep.subr.mxu0 0.0
    %100 = vmatpush1.msra.mxu0 0.0
    %101 = vmatprep.subr.mxu0 0.0
    %102 = vmatpush1.msra.mxu0 %v69
    %103 = vmatprep.subr.mxu0 0.0
    %104 = vmatpush2.msra.mxu0 0.0
    %105 = vmatprep.subr.mxu0 0.0
    %106 = vmatpush2.msra.mxu0 0.0
    %107 = vmatprep.subr.mxu0 0.0
    %108 = vmatpush2.msra.mxu0 0.0
    %109 = vmatprep.subr.mxu0 0.0
    %110 = vmatpush2.msra.mxu0 0.0
    %111 = vmatprep.subr.mxu0 0.0
    %112 = vmatpush2.msra.mxu0 0.0
    %113 = vmatprep.subr.mxu0 0.0
    %114 = vmatpush2.msra.mxu0 0.0
    %115 = vmatprep.subr.mxu0 0.0
    %116 = vmatpush2.msra.mxu0 0.0
    %117 = vmatprep.subr.mxu0 0.0
    %118 = vmatpush2.msra.mxu0 0.0
    %119 = vmatprep.subr.mxu0 0.0
    %120 = vmatpush2.msra.mxu0 0.0
    %121 = vmatprep.subr.mxu0 0.0
    %122 = vmatpush2.msra.mxu0 0.0
    %123 = vmatprep.subr.mxu0 0.0
    %124 = vmatpush2.msra.mxu0 0.0
    %125 = vmatprep.subr.mxu0 0.0
    %126 = vmatpush2.msra.mxu0 0.0
    %127 = vmatprep.subr.mxu0 0.0
    %128 = vmatpush2.msra.mxu0 0.0
    %129 = vmatprep.subr.mxu0 0.0
    %130 = vmatpush2.msra.mxu0 0.0
    %131 = vmatprep.subr.mxu0 0.0
    %132 = vmatpush2.msra.mxu0 0.0
    %133 = vmatprep.subr.mxu0 0.0
    %134 = vmatpush2.msra.mxu0 0.0
    %135 = vmatprep.mubr.f32.mxu0 0.0
    %136 = vmatmul.mubr.f32.gmra.mxu0 %v65
    %v137 = vpop.f32.mrf.mxu0
    %v138 = vadd.f32 0.0, %v137
    %v139 = vpop.f32.mrf.mxu0
    %140 = vdwg.mxu0
    %v142 = vsel %vm67, %v45, 0
    %144 = vmatprep.subr.mxu0 0.0
    %145 = vmatpush1.msra.mxu0 0.0
    %146 = vmatprep.subr.mxu0 0.0
    %147 = vmatpush1.msra.mxu0 0.0
    %148 = vmatprep.subr.mxu0 0.0
    %149 = vmatpush1.msra.mxu0 0.0
    %150 = vmatprep.subr.mxu0 0.0
    %151 = vmatpush1.msra.mxu0 0.0
    %152 = vmatprep.subr.mxu0 0.0
    %153 = vmatpush1.msra.mxu0 0.0
    %154 = vmatprep.subr.mxu0 0.0
    %155 = vmatpush1.msra.mxu0 0.0
    %156 = vmatprep.subr.mxu0 0.0
    %157 = vmatpush1.msra.mxu0 0.0
    %158 = vmatprep.subr.mxu0 0.0
    %159 = vmatpush1.msra.mxu0 0.0
    %160 = vmatprep.subr.mxu0 0.0
    %161 = vmatpush1.msra.mxu0 0.0
    %162 = vmatprep.subr.mxu0 0.0
    %163 = vmatpush1.msra.mxu0 0.0
    %164 = vmatprep.subr.mxu0 0.0
    %165 = vmatpush1.msra.mxu0 0.0
    %166 = vmatprep.subr.mxu0 0.0
    %167 = vmatpush1.msra.mxu0 0.0
    %168 = vmatprep.subr.mxu0 0.0
    %169 = vmatpush1.msra.mxu0 0.0
    %170 = vmatprep.subr.mxu0 0.0
    %171 = vmatpush1.msra.mxu0 0.0
    %172 = vmatprep.subr.mxu0 0.0
    %173 = vmatpush1.msra.mxu0 0.0
    %174 = vmatprep.subr.mxu0 0.0
    %175 = vmatpush1.msra.mxu0 %v142
    %176 = vmatprep.subr.mxu0 0.0
    %177 = vmatpush2.msra.mxu0 0.0
    %178 = vmatprep.subr.mxu0 0.0
    %179 = vmatpush2.msra.mxu0 0.0
    %180 = vmatprep.subr.mxu0 0.0
    %181 = vmatpush2.msra.mxu0 0.0
    %182 = vmatprep.subr.mxu0 0.0
    %183 = vmatpush2.msra.mxu0 0.0
    %184 = vmatprep.subr.mxu0 0.0
    %185 = vmatpush2.msra.mxu0 0.0
    %186 = vmatprep.subr.mxu0 0.0
    %187 = vmatpush2.msra.mxu0 0.0
    %188 = vmatprep.subr.mxu0 0.0
    %189 = vmatpush2.msra.mxu0 0.0
    %190 = vmatprep.subr.mxu0 0.0
    %191 = vmatpush2.msra.mxu0 0.0
    %192 = vmatprep.subr.mxu0 0.0
    %193 = vmatpush2.msra.mxu0 0.0
    %194 = vmatprep.subr.mxu0 0.0
    %195 = vmatpush2.msra.mxu0 0.0
    %196 = vmatprep.subr.mxu0 0.0
    %197 = vmatpush2.msra.mxu0 0.0
    %198 = vmatprep.subr.mxu0 0.0
    %199 = vmatpush2.msra.mxu0 0.0
    %200 = vmatprep.subr.mxu0 0.0
    %201 = vmatpush2.msra.mxu0 0.0
    %202 = vmatprep.subr.mxu0 0.0
    %203 = vmatpush2.msra.mxu0 0.0
    %204 = vmatprep.subr.mxu0 0.0
    %205 = vmatpush2.msra.mxu0 0.0
    %206 = vmatprep.subr.mxu0 0.0
    %207 = vmatpush2.msra.mxu0 0.0
    %208 = vmatprep.mubr.f32.mxu0 0.0
    %209 = vmatmul.mubr.f32.gmra.mxu0 %v65
    %v210 = vpop.f32.mrf.mxu0
    %v211 = vadd.f32 0.0, %v210
    %v212 = vpop.f32.mrf.mxu0
    %213 = vdwg.mxu0
    %v216 = vcombine.low %v138, %v211
    %vm217 = vcmask 523264
    %v218 = vsel %vm217, %v216, 0
    %220 = vmatprep.subr.mxu0 0.0
    %221 = vmatpush1.msra.mxu0 0.0
    %222 = vmatprep.subr.mxu0 0.0
    %223 = vmatpush1.msra.mxu0 0.0
    %224 = vmatprep.subr.mxu0 0.0
    %225 = vmatpush1.msra.mxu0 0.0
    %226 = vmatprep.subr.mxu0 0.0
    %227 = vmatpush1.msra.mxu0 0.0
    %228 = vmatprep.subr.mxu0 0.0
    %229 = vmatpush1.msra.mxu0 0.0
    %230 = vmatprep.subr.mxu0 0.0
    %231 = vmatpush1.msra.mxu0 0.0
    %232 = vmatprep.subr.mxu0 0.0
    %233 = vmatpush1.msra.mxu0 0.0
    %234 = vmatprep.subr.mxu0 0.0
    %235 = vmatpush1.msra.mxu0 0.0
    %236 = vmatprep.subr.mxu0 %v62
    %237 = vmatpush1.msra.mxu0 %v61
    %238 = vmatprep.subr.mxu0 %v60
    %239 = vmatpush1.msra.mxu0 %v59
    %240 = vmatprep.subr.mxu0 %v58
    %241 = vmatpush1.msra.mxu0 %v57
    %242 = vmatprep.subr.mxu0 %v56
    %243 = vmatpush1.msra.mxu0 %v55
    %244 = vmatprep.subr.mxu0 %v54
    %245 = vmatpush1.msra.mxu0 %v53
    %246 = vmatprep.subr.mxu0 %v52
    %247 = vmatpush1.msra.mxu0 %v51
    %248 = vmatprep.subr.mxu0 %v50
    %249 = vmatpush1.msra.mxu0 %v49
    %250 = vmatprep.subr.mxu0 %v48
    %251 = vmatpush1.msra.mxu0 %v47
    %252 = vmatprep.subr.mxu0 0.0
    %253 = vmatpush2.msra.mxu0 0.0
    %254 = vmatprep.subr.mxu0 0.0
    %255 = vmatpush2.msra.mxu0 0.0
    %256 = vmatprep.subr.mxu0 0.0
    %257 = vmatpush2.msra.mxu0 0.0
    %258 = vmatprep.subr.mxu0 0.0
    %259 = vmatpush2.msra.mxu0 0.0
    %260 = vmatprep.subr.mxu0 0.0
    %261 = vmatpush2.msra.mxu0 0.0
    %262 = vmatprep.subr.mxu0 0.0
    %263 = vmatpush2.msra.mxu0 0.0
    %264 = vmatprep.subr.mxu0 0.0
    %265 = vmatpush2.msra.mxu0 0.0
    %266 = vmatprep.subr.mxu0 0.0
    %267 = vmatpush2.msra.mxu0 0.0
    %268 = vmatprep.subr.mxu0 0.0
    %269 = vmatpush2.msra.mxu0 0.0
    %270 = vmatprep.subr.mxu0 0.0
    %271 = vmatpush2.msra.mxu0 0.0
    %272 = vmatprep.subr.mxu0 0.0
    %273 = vmatpush2.msra.mxu0 0.0
    %274 = vmatprep.subr.mxu0 0.0
    %275 = vmatpush2.msra.mxu0 0.0
    %276 = vmatprep.subr.mxu0 0.0
    %277 = vmatpush2.msra.mxu0 0.0
    %278 = vmatprep.subr.mxu0 0.0
    %279 = vmatpush2.msra.mxu0 0.0
    %280 = vmatprep.subr.mxu0 0.0
    %281 = vmatpush2.msra.mxu0 0.0
    %282 = vmatprep.subr.mxu0 0.0
    %283 = vmatpush2.msra.mxu0 0.0
    %284 = vmatprep.mubr.f32.mxu0 0.0
    %285 = vmatmul.mubr.f32.gmra.mxu0 %v218
    %v286 = vpop.f32.mrf.mxu0
    %v287 = vadd.f32 0.0, %v286
    %v288 = vpop.f32.mrf.mxu0
    %v289 = vadd.f32 0.0, %v288
    %290 = vdwg.mxu0
    %v293 = vcombine.low %v287, %v289
    %v294 = vcombine.high %v287, %v289
    %v297 = vld [vmem:[#allocation2] sm:$0xff]
    %v298 = vcombine.high %v293, %v293
    %v299 = vcombine.high %v294, %v294
    %v302 = vsel %vm67, %v293, 0.0
    %v303 = vsel %vm67, %v294, 0.0
    %v304 = vadd.f32 %v302, %v303
    %v305 = vsel %vm67, %v298, 0.0
    %v306 = vsel %vm67, %v299, 0.0
    %v307 = vadd.f32 %v305, %v306
    %v310 = vcombine.low %v304, %v307
    %v312 = vadd.f32 %v297, %v310
    %313 = vst [vmem:[#allocation2] sm:$0xff] %v312
    %v314 = vld [vmem:[#allocation3] sm:$0xff]
    %v315 = vmul.f32 %v293, %v293
    %v316 = vmul.f32 %v294, %v294
    %v319 = vcombine.high %v315, %v315
    %v320 = vcombine.high %v316, %v316
    %v323 = vsel %vm67, %v315, 0.0
    %v324 = vsel %vm67, %v316, 0.0
    %v325 = vadd.f32 %v323, %v324
    %v326 = vsel %vm67, %v319, 0.0
    %v327 = vsel %vm67, %v320, 0.0
    %v328 = vadd.f32 %v326, %v327
    %v331 = vcombine.low %v325, %v328
    %v333 = vadd.f32 %v314, %v331
    %334 = vst [vmem:[#allocation3] sm:$0xff] %v333
    // Predicated region
    $region30: #{attention_block.2} parent=1 // pred_check
      _
    $region31: #{attention_block.2} parent=1 // pred_check_branch
      %336 = sbr.rel (%p38) target = $region33
    $region32: #{attention_block.2} parent=1 // pred_region
      %v337 = vld [vmem:[#allocation2] sm:$0xff]
      %v339 = vcombine.high %v337, %v337
      %v341 = vsel %vm67, %v337, 0.0
      %v342 = vsel %vm67, %v339, 0.0
      %v343 = vadd.f32 %v341, %v342
      %344 = vadd.xlane.f32.xlu0 %v343
      %v345 = vpop.xlane.xlu0 %344
      %v346 = vld [vmem:[#allocation3] sm:$0xff]
      %v348 = vcombine.high %v346, %v346
      %v350 = vsel %vm67, %v346, 0.0
      %v351 = vsel %vm67, %v348, 0.0
      %v352 = vadd.f32 %v350, %v351
      %353 = vadd.xlane.f32.xlu0 %v352
      %v354 = vpop.xlane.xlu0 %353
      %v355 = vmul.f32 %v345, 0.001953125
      %v356 = vmul.f32 %v354, 0.001953125
      %v357 = vmul.f32 %v355, %v355
      %v358 = vsub.f32 %v356, %v357
      %v359 = vld [vmem:[%s3] sm:$0xf]
      %v360 = vadd.f32 %v358, 1e-05
      %v361 = vrsqrt.pop %v360
      %v362 = vmul.f32 %v359, %v361
      %vm363 = vcmask 3072
      %364 = vst.msk [vmem:[%s5] sm:$0xf] %vm363, %v362
      %v365 = vld [vmem:[%s4] sm:$0xf]
      %v366 = vmul.f32 %v355, %v362
      %v367 = vsub.f32 %v365, %v366
      %368 = vst.msk [vmem:[%s6] sm:$0xf] %vm363, %v367
    $region33: #{attention_block.2} parent=1 // pred_fallthru
      _
    // Predicated region
    $region34: #{attention_block.2} parent=1 // pred_check
      _
    $region35: #{attention_block.2} parent=1 // pred_check_branch
      %370 = sbr.rel (0) target = $region37
    $region36: #{attention_block.2} parent=1 // pred_region
      _
    $region37: #{attention_block.2} parent=1 // pred_fallthru
      _
    // Predicated region
    $region38: #{attention_block.2} parent=1 // pred_check
      _
    $region39: #{attention_block.2} parent=1 // pred_check_branch
      %372 = sbr.rel (0) target = $region41
    $region40: #{attention_block.2} parent=1 // pred_region
      _
    $region41: #{attention_block.2} parent=1 // pred_fallthru
      _
    // Predicated region
    $region42: #{attention_block.2} parent=1 // pred_check
      _
    $region43: #{attention_block.2} parent=1 // pred_check_branch
      %374 = sbr.rel (0) target = $region45
    $region44: #{attention_block.2} parent=1 // pred_region
      _
    $region45: #{attention_block.2} parent=1 // pred_fallthru
      _
    // Predicated region
    $region46: #{attention_block.2} parent=1 // pred_check
      _
    $region47: #{attention_block.2} parent=1 // pred_check_branch
      %376 = sbr.rel (0) target = $region49
    $region48: #{attention_block.2} parent=1 // pred_region
      _
    $region49: #{attention_block.2} parent=1 // pred_fallthru
      _
    %377 = vsyncpa [#allocation5], 1

</llo_original>
